<compile_context>
chip_gen: v7x
topology: tpu7x:2x2x1
jax: 0.10.0
libtpu: 0.0.40
codegen_flags: <defaults>
</compile_context>

<pallas_src>
import jax
import jax.numpy as jnp
from jax.experimental import pallas as pl
from jax.experimental.pallas import tpu as pltpu


def _mask_l1_kernel(pred_ref, gt_ref, mask_ref, out_ref, num_sc, den_sc):
    n = pl.program_id(0)
    h = pl.program_id(1)

    @pl.when(jnp.logical_and(n == 0, h == 0))
    def _init():
        num_sc[...] = jnp.zeros_like(num_sc)
        den_sc[...] = jnp.zeros_like(den_sc)

    # Elementwise math in f32 on the VPU regardless of the input dtype.
    p = pred_ref[0, 0].astype(jnp.float32)          # (th, W)  -- channel 0 only
    g = gt_ref[0].astype(jnp.float32)               # (th, W)
    m = mask_ref[0].astype(jnp.float32)             # (th, W)

    num_sc[...] += jnp.sum(jnp.abs(p - g) * m, keepdims=True)   # (1, 1)
    den_sc[...] += jnp.sum(m, keepdims=True)                    # (1, 1)

    @pl.when(jnp.logical_and(n == pl.num_programs(0) - 1,
                             h == pl.num_programs(1) - 1))
    def _finalize():
        num = num_sc[...]
        den = den_sc[...]
        # PyTorch returns mask_sum (== 0) when the mask is empty; the
        # data-dependent .item() branch becomes an in-kernel select.
        out_ref[...] = jnp.where(den == 0.0, jnp.zeros_like(num), num / den)


def _pick_h_tile(H, W, itemsize, budget_bytes=8 << 20):
    """Largest H-tile that keeps the double-buffered working set small and
    satisfies the TPU sublane constraint (multiple of 8, or the full dim)."""
    per_row = 3 * 2 * W * max(itemsize, 4)   # 3 operands, double-buffered, f32 worst case
    if H * per_row <= budget_bytes:
        return H
    divisors = [t for t in range(8, H, 8)
                if H % t == 0 and t * per_row <= budget_bytes]
    if divisors:
        return max(divisors)
    return H  # TODO(synk): pathologically wide rows would also need W-tiling.


def mask_l1_loss(pred, gt, mask, *, block_h=None):
    """pred: (N, C, H, W); gt, mask: (N, H, W).  Returns a scalar f32 loss."""
    N, C, H, W = pred.shape
    assert gt.shape == (N, H, W), (gt.shape, pred.shape)
    assert mask.shape == (N, H, W), (mask.shape, pred.shape)

    if block_h is None:
        th = _pick_h_tile(H, W, jnp.dtype(pred.dtype).itemsize)
    else:
        th = block_h
        assert H % th == 0 and (th == H or th % 8 == 0), (H, th)
    grid = (N, H // th)

    n_elems = N * H * W
    cost = pl.CostEstimate(
        flops=5 * n_elems,
        transcendentals=0,
        bytes_accessed=n_elems * (jnp.dtype(pred.dtype).itemsize
                                  + jnp.dtype(gt.dtype).itemsize
                                  + jnp.dtype(mask.dtype).itemsize) + 4,
    )

    out = pl.pallas_call(
        _mask_l1_kernel,
        out_shape=jax.ShapeDtypeStruct((1, 1), jnp.float32),
        grid=grid,
        in_specs=[
            # Pull channel 0 straight out of NCHW pred — never materialize pred[:, 0].
            pl.BlockSpec((1, 1, th, W), lambda n, h: (n, 0, h, 0)),
            pl.BlockSpec((1, th, W), lambda n, h: (n, h, 0)),
            pl.BlockSpec((1, th, W), lambda n, h: (n, h, 0)),
        ],
        out_specs=pl.BlockSpec((1, 1), lambda n, h: (0, 0)),
        scratch_shapes=[
            pltpu.VMEM((1, 1), jnp.float32),   # running sum(|pred0 - gt| * mask)
            pltpu.VMEM((1, 1), jnp.float32),   # running sum(mask)
        ],
        compiler_params=pltpu.CompilerParams(
            dimension_semantics=("arbitrary", "arbitrary")),
        cost_estimate=cost,
    )(pred, gt, mask)
    return out[0, 0]


# ---------------------------------------------------------------------------
if __name__ == "__main__":
    key = jax.random.PRNGKey(0)
    kp, kg, km = jax.random.split(key, 3)

    # Small shapes consistent with the module: pred (N, C, H, W), gt/mask (N, H, W).
    N, C, H, W = 2, 4, 16, 16
    pred = jax.random.normal(kp, (N, C, H, W), jnp.float32)
    gt = jax.random.normal(kg, (N, H, W), jnp.float32)
    mask = (jax.random.uniform(km, (N, H, W)) > 0.5).astype(jnp.float32)

    loss = jax.block_until_ready(mask_l1_loss(pred, gt, mask))
    ref = jnp.sum(jnp.abs(pred[:, 0] - gt) * mask) / jnp.sum(mask)
    assert loss.shape == (), loss.shape
    assert bool(jnp.isfinite(loss))
    assert bool(jnp.allclose(loss, ref, rtol=1e-5, atol=1e-5)), (loss, ref)

    # Empty-mask branch: PyTorch returns mask_sum, i.e. 0.
    zero_loss = jax.block_until_ready(
        mask_l1_loss(pred, gt, jnp.zeros_like(mask)))
    assert bool(jnp.allclose(zero_loss, 0.0)), zero_loss

    # Exercise the multi-tile accumulation path (grid = (2, 8)).
    k1, k2, k3 = jax.random.split(jax.random.PRNGKey(1), 3)
    N2, C2, H2, W2 = 2, 3, 64, 128
    pred2 = jax.random.normal(k1, (N2, C2, H2, W2), jnp.float32)
    gt2 = jax.random.normal(k2, (N2, H2, W2), jnp.float32)
    mask2 = (jax.random.uniform(k3, (N2, H2, W2)) > 0.3).astype(jnp.float32)
    loss2 = jax.block_until_ready(mask_l1_loss(pred2, gt2, mask2, block_h=8))
    ref2 = jnp.sum(jnp.abs(pred2[:, 0] - gt2) * mask2) / jnp.sum(mask2)
    assert bool(jnp.allclose(loss2, ref2, rtol=1e-5, atol=1e-5)), (loss2, ref2)

    print("KERNEL_OK")
</pallas_src>

<mosaic_0001>
module attributes {stable_mosaic.version = 11 : i64} {
  func.func @_mask_l1_kernel(%arg0: i32, %arg1: i32, %arg2: memref<1x1x16x16xf32, #tpu.memory_space<vmem>>, %arg3: memref<1x16x16xf32, #tpu.memory_space<vmem>>, %arg4: memref<1x16x16xf32, #tpu.memory_space<vmem>>, %arg5: memref<1x1xf32, #tpu.memory_space<vmem>>, %arg6: memref<1x1xf32, #tpu.memory_space<vmem>>, %arg7: memref<1x1xf32, #tpu.memory_space<vmem>>) attributes {dimension_semantics = [#tpu.dimension_semantics<arbitrary>, #tpu.dimension_semantics<arbitrary>], iteration_bounds = array<i64: 2, 1>, scalar_prefetch = 0 : i64, scratch_operands = 2 : i64, tpu.core_type = #tpu.core_type<tc>, window_params = [{transform_indices = @transform_0, window_bounds = array<i64: 1, 1, 16, 16>}, {transform_indices = @transform_1, window_bounds = array<i64: 1, 16, 16>}, {transform_indices = @transform_2, window_bounds = array<i64: 1, 16, 16>}, {pipeline_mode = #tpu.pipeline_mode<synchronous>, transform_indices = @transform_3, window_bounds = array<i64: 1, 1>}]} {
    %c0_i32 = arith.constant 0 : i32
    %0 = arith.cmpi eq, %arg0, %c0_i32 : i32
    %c0_i32_0 = arith.constant 0 : i32
    %1 = arith.cmpi eq, %arg1, %c0_i32_0 : i32
    %2 = arith.andi %0, %1 : i1
    %3 = arith.extui %2 : i1 to i32
    %c0_i32_1 = arith.constant 0 : i32
    %4 = arith.cmpi ne, %3, %c0_i32_1 : i32
    scf.if %4 {
      %cst_22 = arith.constant 0.000000e+00 : f32
      %35 = vector.broadcast %cst_22 : f32 to vector<1x1xf32>
      %c0_23 = arith.constant 0 : index
      %c0_24 = arith.constant 0 : index
      %36 = vector.load %arg6[%c0_23, %c0_24] : memref<1x1xf32, #tpu.memory_space<vmem>>, vector<1x1xf32>
      tpu.vector_store %arg6[%c0_23, %c0_24], %35 {strides = array<i32>} : memref<1x1xf32, #tpu.memory_space<vmem>>, vector<1x1xf32>,
      %cst_25 = arith.constant 0.000000e+00 : f32
      %37 = vector.broadcast %cst_25 : f32 to vector<1x1xf32>
      %c0_26 = arith.constant 0 : index
      %c0_27 = arith.constant 0 : index
      %38 = vector.load %arg7[%c0_26, %c0_27] : memref<1x1xf32, #tpu.memory_space<vmem>>, vector<1x1xf32>
      tpu.vector_store %arg7[%c0_26, %c0_27], %37 {strides = array<i32>} : memref<1x1xf32, #tpu.memory_space<vmem>>, vector<1x1xf32>,
    } else {
    }
    %c0 = arith.constant 0 : index
    %c0_2 = arith.constant 0 : index
    %c0_3 = arith.constant 0 : index
    %c0_4 = arith.constant 0 : index
    %5 = vector.load %arg2[%c0, %c0_2, %c0_3, %c0_4] : memref<1x1x16x16xf32, #tpu.memory_space<vmem>>, vector<1x1x16x16xf32>
    %6 = vector.shape_cast %5 : vector<1x1x16x16xf32> to vector<16x16xf32>
    %c0_5 = arith.constant 0 : index
    %c0_6 = arith.constant 0 : index
    %c0_7 = arith.constant 0 : index
    %7 = vector.load %arg3[%c0_5, %c0_6, %c0_7] : memref<1x16x16xf32, #tpu.memory_space<vmem>>, vector<1x16x16xf32>
    %8 = vector.shape_cast %7 : vector<1x16x16xf32> to vector<16x16xf32>
    %c0_8 = arith.constant 0 : index
    %c0_9 = arith.constant 0 : index
    %c0_10 = arith.constant 0 : index
    %9 = vector.load %arg4[%c0_8, %c0_9, %c0_10] : memref<1x16x16xf32, #tpu.memory_space<vmem>>, vector<1x16x16xf32>
    %10 = vector.shape_cast %9 : vector<1x16x16xf32> to vector<16x16xf32>
    %c0_11 = arith.constant 0 : index
    %c0_12 = arith.constant 0 : index
    %11 = vector.load %arg6[%c0_11, %c0_12] : memref<1x1xf32, #tpu.memory_space<vmem>>, vector<1x1xf32>
    %12 = arith.subf %6, %8 : vector<16x16xf32>
    %13 = math.absf %12 : vector<16x16xf32>
    %14 = arith.mulf %13, %10 : vector<16x16xf32>
    %15 = vector.shape_cast %14 : vector<16x16xf32> to vector<1x16x16xf32>
    %cst = arith.constant dense<0.000000e+00> : vector<1xf32>
    %16 = vector.multi_reduction <add>, %15, %cst [1, 2] : vector<1x16x16xf32> to vector<1xf32>
    %17 = vector.shape_cast %16 : vector<1xf32> to vector<1x1x1xf32>
    %18 = vector.extract %17[0, 0, 0] : f32 from vector<1x1x1xf32>
    %19 = vector.broadcast %18 : f32 to vector<1x1xf32>
    %20 = arith.addf %11, %19 : vector<1x1xf32>
    %c0_13 = arith.constant 0 : index
    %c0_14 = arith.constant 0 : index
    %21 = vector.load %arg6[%c0_13, %c0_14] : memref<1x1xf32, #tpu.memory_space<vmem>>, vector<1x1xf32>
    tpu.vector_store %arg6[%c0_13, %c0_14], %20 {strides = array<i32>} : memref<1x1xf32, #tpu.memory_space<vmem>>, vector<1x1xf32>,
    %c0_15 = arith.constant 0 : index
    %c0_16 = arith.constant 0 : index
    %22 = vector.load %arg7[%c0_15, %c0_16] : memref<1x1xf32, #tpu.memory_space<vmem>>, vector<1x1xf32>
    %23 = vector.shape_cast %10 : vector<16x16xf32> to vector<1x16x16xf32>
    %cst_17 = arith.constant dense<0.000000e+00> : vector<1xf32>
    %24 = vector.multi_reduction <add>, %23, %cst_17 [1, 2] : vector<1x16x16xf32> to vector<1xf32>
    %25 = vector.shape_cast %24 : vector<1xf32> to vector<1x1x1xf32>
    %26 = vector.extract %25[0, 0, 0] : f32 from vector<1x1x1xf32>
    %27 = vector.broadcast %26 : f32 to vector<1x1xf32>
    %28 = arith.addf %22, %27 : vector<1x1xf32>
    %c0_18 = arith.constant 0 : index
    %c0_19 = arith.constant 0 : index
    %29 = vector.load %arg7[%c0_18, %c0_19] : memref<1x1xf32, #tpu.memory_space<vmem>>, vector<1x1xf32>
    tpu.vector_store %arg7[%c0_18, %c0_19], %28 {strides = array<i32>} : memref<1x1xf32, #tpu.memory_space<vmem>>, vector<1x1xf32>,
    %c1_i32 = arith.constant 1 : i32
    %30 = arith.cmpi eq, %arg0, %c1_i32 : i32
    %c0_i32_20 = arith.constant 0 : i32
    %31 = arith.cmpi eq, %arg1, %c0_i32_20 : i32
    %32 = arith.andi %30, %31 : i1
    %33 = arith.extui %32 : i1 to i32
    %c0_i32_21 = arith.constant 0 : i32
    %34 = arith.cmpi ne, %33, %c0_i32_21 : i32
    scf.if %34 {
      %c0_22 = arith.constant 0 : index
      %c0_23 = arith.constant 0 : index
      %35 = vector.load %arg6[%c0_22, %c0_23] : memref<1x1xf32, #tpu.memory_space<vmem>>, vector<1x1xf32>
      %c0_24 = arith.constant 0 : index
      %c0_25 = arith.constant 0 : index
      %36 = vector.load %arg7[%c0_24, %c0_25] : memref<1x1xf32, #tpu.memory_space<vmem>>, vector<1x1xf32>
      %cst_26 = arith.constant 0.000000e+00 : f32
      %37 = vector.broadcast %cst_26 : f32 to vector<1x1xf32>
      %38 = arith.cmpf oeq, %36, %37 : vector<1x1xf32>
      %cst_27 = arith.constant 0.000000e+00 : f32
      %39 = vector.broadcast %cst_27 : f32 to vector<1x1xf32>
      %40 = arith.divf %35, %36 : vector<1x1xf32>
      %41 = arith.select %38, %39, %40 : vector<1x1xi1>, vector<1x1xf32>
      %c0_28 = arith.constant 0 : index
      %c0_29 = arith.constant 0 : index
      %42 = vector.load %arg5[%c0_28, %c0_29] : memref<1x1xf32, #tpu.memory_space<vmem>>, vector<1x1xf32>
      tpu.vector_store %arg5[%c0_28, %c0_29], %41 {strides = array<i32>} : memref<1x1xf32, #tpu.memory_space<vmem>>, vector<1x1xf32>,
    } else {
    }
    return
  }
  func.func @transform_0(%arg0: i32, %arg1: i32) -> (i32, i32, i32, i32) {
    %c0_i32 = arith.constant 0 : i32
    %c0_i32_0 = arith.constant 0 : i32
    %c0_i32_1 = arith.constant 0 : i32
    return %arg0, %c0_i32, %arg1, %c0_i32_0 : i32, i32, i32, i32
  }
  func.func @transform_1(%arg0: i32, %arg1: i32) -> (i32, i32, i32) {
    %c0_i32 = arith.constant 0 : i32
    %c0_i32_0 = arith.constant 0 : i32
    return %arg0, %arg1, %c0_i32 : i32, i32, i32
  }
  func.func @transform_2(%arg0: i32, %arg1: i32) -> (i32, i32, i32) {
    %c0_i32 = arith.constant 0 : i32
    %c0_i32_0 = arith.constant 0 : i32
    return %arg0, %arg1, %c0_i32 : i32, i32, i32
  }
  func.func @transform_3(%arg0: i32, %arg1: i32) -> (i32, i32) {
    %c0_i32 = arith.constant 0 : i32
    %c0_i32_0 = arith.constant 0 : i32
    %c0_i32_1 = arith.constant 0 : i32
    return %c0_i32, %c0_i32_0 : i32, i32
  }
}

</mosaic_0001>

<llo_original>
// kernel: tpu_custom_call.1
$region0: #{tpu_custom_call.1}
  #allocation0 [shape = 'u32[]', space=smem, size = 0x4, offset = 0x4, fixed_abs, tag = 'smem constant byte address 0x4 - core index']
  #allocation1 [shape = 'u32[144,128]{1,0:T(1,128)}', space=vmem, size = 0x12000, scoped, tag = 'internal scratch']
  #allocation2 [shape = 'f32[1,1]{1,0:T(1,128)}', space=vmem, size = 0x200, scoped, tag = 'scratch operand']
  #allocation3 [shape = 'f32[1,1]{1,0:T(1,128)}', space=vmem, size = 0x200, scoped, tag = 'scratch operand']
  %s0 = inlined_call_operand.hbm [shape: f32[2,4,16,16], index: 0, kind: input, shape index: {}]
  %s1 = inlined_call_operand.hbm [shape: f32[2,16,16], index: 1, kind: input, shape index: {}]
  %s2 = inlined_call_operand.hbm [shape: f32[2,16,16], index: 2, kind: input, shape index: {}]
  %s3 = inlined_call_operand.hbm [shape: f32[1,1], index: 3, kind: output, shape index: {}]
  %s4 = sld [smem:[#allocation0]]
  $region65: #{tpu_custom_call.1} parent=0
    _
  %s6 = ssub.s32 1, %s4
  %s7 = scalar_select 0, %s6, %s4
  $region1: #{tpu_custom_call.1} parent=0
    #allocation4 [shape = 'u8[16384]{0}', space=vmem, size = 0x4000, scoped, tag = 'input window, operand 0']
    #allocation5 [shape = 's32[2]{0}', space=sflag, size = 0x8, scoped, tag = 'scoped memory for tpu_custom_call.1']
    #allocation6 [shape = 's32[2]{0}', space=sflag, size = 0x8, scoped, tag = 'scoped memory for tpu_custom_call.1']
    #allocation7 [shape = 'u8[16384]{0}', space=vmem, size = 0x4000, scoped, tag = 'input window, operand 1']
    #allocation8 [shape = 's32[2]{0}', space=sflag, size = 0x8, scoped, tag = 'scoped memory for tpu_custom_call.1']
    #allocation9 [shape = 'u8[16384]{0}', space=vmem, size = 0x4000, scoped, tag = 'input window, operand 2']
    #allocation10 [shape = 'u8[512]{0}', space=vmem, size = 0x400, scoped, tag = 'output window, operand 0, single buffered']
    %8 = vsyncpa [#allocation5], 0
    %s9 = scalar_lea.sflag [#allocation5], 1
    %10 = vsyncpa %s9, 0
    %11 = vsyncpa [#allocation8], 0
    %s12 = scalar_lea.sflag [#allocation8], 1
    %13 = vsyncpa %s12, 0
    %14 = vsyncpa [#allocation6], 0
    loop: start=0, step=1, limit=4
    $region2: #{tpu_custom_call.1} parent=1 // loop_pre_header
      _
    $region3: #{tpu_custom_call.1} parent=1 // loop_header
      %s16 = sphi 0, %s20
      %p17 = scmp.ge.s32.totalorder %s16, 4
      %s23 = sphi 0, %s35
      %s24 = sphi 0, %s31
      %s25 = sphi 0, %s23
      %s26 = sphi 0, %s24
      %s27 = sphi 0, %s25
      %s28 = sphi 0, %s26
      %s40 = sphi 0, %s42
      %s43 = sphi 0, %s40
      %s44 = sphi 0, %s43
      %s60 = sphi 0, %s44
      %s68 = sphi 0, %s70
      %s71 = sphi 0, %s68
      %s72 = sphi 0, %s71
      %s88 = sphi 0, %s72
      %s96 = sphi 0, %s98
      %s99 = sphi 0, %s96
      %s100 = sphi 0, %s99
      %s116 = sphi 0, %s100
      %s120 = sphi 0, %s120
      %s122 = sphi 0, %s120
      %s123 = sphi 0, %s122
      %s137 = sphi 0, %s123
    $region4: #{tpu_custom_call.1} parent=1 // loop_header_branch
      %19 = sbr.rel (%p17) target = $region8
    $region5: #{tpu_custom_call.1} parent=1 // loop_body
      %s21 = ssub.s32 %s16, 1
      %s22 = ssub.s32 %s16, 2
      %s29 = sadd.s32 1, %s24
      %p30 = scmp.ge.s32.totalorder %s29, 1
      %s31 = scalar_select %p30, 0, %s29
      %s32 = sadd.s32 1, %s23
      %s33 = scalar_select %p30, %s32, %s23
      %p34 = scmp.ge.s32.totalorder %s33, 2
      %s35 = scalar_select %p34, 0, %s33
      %s36 = ssub.s32 %s23, %s35
      %s37 = ssub.s32 %s24, %s31
      %s38 = sor.u32 %s36, %s37
      %p39 = scmp.eq.s32.totalorder %s38, 0
      %s41 = sadd.s32 %s40, 1
      %s42 = scalar_select %p39, %s40, %s41
      %p45 = pneg %p39
      %p46 = scmp.eq.s32.totalorder %s16, 1
      %p47 = por %p45, %p46
      %p48 = scmp.ne.s32.totalorder %s40, %s43
      %p49 = scmp.eq.s32.totalorder %s16, 0
      %p50 = por %p48, %p49
      %p51 = scmp.ne.s32.totalorder %s40, %s43
      %p52 = scmp.eq.s32.totalorder %s21, 1
      %p53 = por %p51, %p52
      %p54 = scmp.ne.s32.totalorder %s43, %s44
      %p55 = scmp.eq.s32.totalorder %s21, 0
      %p56 = por %p54, %p55
      %p57 = scmp.ne.s32.totalorder %s43, %s44
      %p58 = scmp.eq.s32.totalorder %s22, 1
      %p59 = por %p57, %p58
      %p61 = scmp.ne.s32.totalorder %s44, %s60
      %p62 = scmp.eq.s32.totalorder %s22, 0
      %p63 = por %p61, %p62
      %s64 = ssub.s32 %s23, %s35
      %s65 = ssub.s32 %s24, %s31
      %s66 = sor.u32 %s64, %s65
      %p67 = scmp.eq.s32.totalorder %s66, 0
      %s69 = sadd.s32 %s68, 1
      %s70 = scalar_select %p67, %s68, %s69
      %p73 = pneg %p67
      %p74 = scmp.eq.s32.totalorder %s16, 1
      %p75 = por %p73, %p74
      %p76 = scmp.ne.s32.totalorder %s68, %s71
      %p77 = scmp.eq.s32.totalorder %s16, 0
      %p78 = por %p76, %p77
      %p79 = scmp.ne.s32.totalorder %s68, %s71
      %p80 = scmp.eq.s32.totalorder %s21, 1
      %p81 = por %p79, %p80
      %p82 = scmp.ne.s32.totalorder %s71, %s72
      %p83 = scmp.eq.s32.totalorder %s21, 0
      %p84 = por %p82, %p83
      %p85 = scmp.ne.s32.totalorder %s71, %s72
      %p86 = scmp.eq.s32.totalorder %s22, 1
      %p87 = por %p85, %p86
      %p89 = scmp.ne.s32.totalorder %s72, %s88
      %p90 = scmp.eq.s32.totalorder %s22, 0
      %p91 = por %p89, %p90
      %s92 = ssub.s32 %s23, %s35
      %s93 = ssub.s32 %s24, %s31
      %s94 = sor.u32 %s92, %s93
      %p95 = scmp.eq.s32.totalorder %s94, 0
      %s97 = sadd.s32 %s96, 1
      %s98 = scalar_select %p95, %s96, %s97
      %p101 = pneg %p95
      %p102 = scmp.eq.s32.totalorder %s16, 1
      %p103 = por %p101, %p102
      %p104 = scmp.ne.s32.totalorder %s96, %s99
      %p105 = scmp.eq.s32.totalorder %s16, 0
      %p106 = por %p104, %p105
      %p107 = scmp.ne.s32.totalorder %s96, %s99
      %p108 = scmp.eq.s32.totalorder %s21, 1
      %p109 = por %p107, %p108
      %p110 = scmp.ne.s32.totalorder %s99, %s100
      %p111 = scmp.eq.s32.totalorder %s21, 0
      %p112 = por %p110, %p111
      %p113 = scmp.ne.s32.totalorder %s99, %s100
      %p114 = scmp.eq.s32.totalorder %s22, 1
      %p115 = por %p113, %p114
      %p117 = scmp.ne.s32.totalorder %s100, %s116
      %p118 = scmp.eq.s32.totalorder %s22, 0
      %p119 = por %p117, %p118
      %s121 = sadd.s32 %s120, 1
      %p124 = scmp.eq.s32.totalorder %s16, 1
      %p125 = scmp.ne.s32.totalorder %s120, %s122
      %p126 = scmp.eq.s32.totalorder %s16, 0
      %p127 = por %p125, %p126
      %p128 = scmp.ne.s32.totalorder %s120, %s122
      %p129 = scmp.eq.s32.totalorder %s21, 1
      %p130 = por %p128, %p129
      %p131 = scmp.ne.s32.totalorder %s122, %s123
      %p132 = scmp.eq.s32.totalorder %s21, 0
      %p133 = por %p131, %p132
      %p134 = scmp.ne.s32.totalorder %s122, %s123
      %p135 = scmp.eq.s32.totalorder %s22, 1
      %p136 = por %p134, %p135
      %p138 = scmp.ne.s32.totalorder %s123, %s137
      %p139 = scmp.eq.s32.totalorder %s22, 0
      %p140 = por %p138, %p139
      %p141 = scmp.le.s32.totalorder 1, %s16
      %p142 = scmp.lt.s32.totalorder %s16, 3
      %p143 = pnand %p141, %p142
      %p144 = pneg %p143
      // Predicated region
      $region9: #{tpu_custom_call.1} parent=5 // pred_check
        _
      $region10: #{tpu_custom_call.1} parent=5 // pred_check_branch
        %146 = sbr.rel (%p143) target = $region12
      $region11: #{tpu_custom_call.1} parent=5 // pred_region
        %s147 = ssub.s32 %s16, 1
      $region12: #{tpu_custom_call.1} parent=5 // pred_fallthru
        _
      %p148 = scmp.lt.s32.totalorder %s16, 2
      // Predicated region
      $region13: #{tpu_custom_call.1} parent=5 // pred_check
        %p149 = pneg %p148
      $region14: #{tpu_custom_call.1} parent=5 // pred_check_branch
        %151 = sbr.rel (%p149) target = $region16
      $region15: #{tpu_custom_call.1} parent=5 // pred_region
        // Predicated region
        $region17: #{tpu_custom_call.1} parent=15 // pred_check
          %p152 = pneg %p50
        $region18: #{tpu_custom_call.1} parent=15 // pred_check_branch
          %154 = sbr.rel (%p152) target = $region20
        $region19: #{tpu_custom_call.1} parent=15 // pred_region
          %s155 = sand.u32 %s40, 1
          %s156 = scalar_lea.sflag [#allocation5], %s155
          %s157 = sand.u32 %s40, 1
          %s158 = smul.addr %s157, 16
          %s159 = scalar_lea.vmem [#allocation4], %s158
          %s160 = smul.u32 2, %s24
          %s162 = ssub.s32 256, 256
          %163 = vsyncadd %s156, %s162
          %s164 = smul.addr %s23, 8
          %s165 = sadd.s32 %s160, %s164
          %s166 = smul.addr %s165, 128
          %s167 = scalar_lea.hbm %s0, %s166
          %s168 = sshll.u32 %s159, 4
          %s169 = int_to_ptr.vmem [resolvable:$true] %s168
          %174 = dma.hbm_to_vmem [thread:$0]  %s167, 256, %s169, %s156, 128, 128, 8
        $region20: #{tpu_custom_call.1} parent=15 // pred_fallthru
          _
        // Predicated region
        $region21: #{tpu_custom_call.1} parent=15 // pred_check
          %p175 = pneg %p78
        $region22: #{tpu_custom_call.1} parent=15 // pred_check_branch
          %177 = sbr.rel (%p175) target = $region24
        $region23: #{tpu_custom_call.1} parent=15 // pred_region
          %s178 = sand.u32 %s16, 1
          %s179 = scalar_lea.sflag [#allocation8], %s178
          %s180 = sand.u32 %s68, 1
          %s181 = smul.addr %s180, 16
          %s182 = scalar_lea.vmem [#allocation7], %s181
          %s183 = smul.u32 2, %s24
          %s185 = ssub.s32 256, 256
          %186 = vsyncadd %s179, %s185
          %s187 = smul.addr %s23, 2
          %s188 = sadd.s32 %s183, %s187
          %s189 = smul.addr %s188, 128
          %s190 = scalar_lea.hbm %s1, %s189
          %s191 = sshll.u32 %s182, 4
          %s192 = int_to_ptr.vmem [resolvable:$true] %s191
          %197 = dma.hbm_to_vmem [thread:$0]  %s190, 256, %s192, %s179, 128, 128, 8
        $region24: #{tpu_custom_call.1} parent=15 // pred_fallthru
          _
        // Predicated region
        $region25: #{tpu_custom_call.1} parent=15 // pred_check
          %p198 = pneg %p106
        $region26: #{tpu_custom_call.1} parent=15 // pred_check_branch
          %200 = sbr.rel (%p198) target = $region28
        $region27: #{tpu_custom_call.1} parent=15 // pred_region
          %s201 = sand.u32 %s16, 1
          %s202 = scalar_lea.sflag [#allocation8], %s201
          %s203 = sand.u32 %s96, 1
          %s204 = smul.addr %s203, 16
          %s205 = scalar_lea.vmem [#allocation9], %s204
          %s206 = smul.u32 2, %s24
          %s208 = ssub.s32 256, 256
          %209 = vsyncadd %s202, %s208
          %s210 = smul.addr %s23, 2
          %s211 = sadd.s32 %s206, %s210
          %s212 = smul.addr %s211, 128
          %s213 = scalar_lea.hbm %s2, %s212
          %s214 = sshll.u32 %s205, 4
          %s215 = int_to_ptr.vmem [resolvable:$true] %s214
          %220 = dma.hbm_to_vmem [thread:$0]  %s213, 256, %s215, %s202, 128, 128, 8
        $region28: #{tpu_custom_call.1} parent=15 // pred_fallthru
          _
      $region16: #{tpu_custom_call.1} parent=5 // pred_fallthru
        _
      %p221 = scmp.le.s32.totalorder 1, %s16
      %p222 = scmp.lt.s32.totalorder %s16, 3
      %p223 = pnand %p221, %p222
      %p224 = pneg %p223
      // Predicated region
      $region29: #{tpu_custom_call.1} parent=5 // pred_check
        _
      $region30: #{tpu_custom_call.1} parent=5 // pred_check_branch
        %226 = sbr.rel (%p223) target = $region32
      $region31: #{tpu_custom_call.1} parent=5 // pred_region
        %s227 = ssub.s32 %s16, 1
        %s228 = sand.u32 %s43, 1
        %s229 = scalar_lea.sflag [#allocation5], %s228
        %s230 = sand.u32 %s43, 1
        %s231 = smul.addr %s230, 16
        %s232 = scalar_lea.vmem [#allocation4], %s231
        // Predicated region
        $region33: #{tpu_custom_call.1} parent=31 // pred_check
          %p233 = pneg %p56
        $region34: #{tpu_custom_call.1} parent=31 // pred_check_branch
          %235 = sbr.rel (%p233) target = $region36
        $region35: #{tpu_custom_call.1} parent=31 // pred_region
          %236 = dma.done %s229, 256
        $region36: #{tpu_custom_call.1} parent=31 // pred_fallthru
          _
        %s237 = sand.u32 %s21, 1
        %s238 = scalar_lea.sflag [#allocation8], %s237
        %s239 = sand.u32 %s71, 1
        %s240 = smul.addr %s239, 16
        %s241 = scalar_lea.vmem [#allocation7], %s240
        // Predicated region
        $region37: #{tpu_custom_call.1} parent=31 // pred_check
          %p242 = pneg %p84
        $region38: #{tpu_custom_call.1} parent=31 // pred_check_branch
          %244 = sbr.rel (%p242) target = $region40
        $region39: #{tpu_custom_call.1} parent=31 // pred_region
          %245 = dma.done %s238, 256
        $region40: #{tpu_custom_call.1} parent=31 // pred_fallthru
          _
        %s246 = sand.u32 %s21, 1
        %s247 = scalar_lea.sflag [#allocation8], %s246
        %s248 = sand.u32 %s99, 1
        %s249 = smul.addr %s248, 16
        %s250 = scalar_lea.vmem [#allocation9], %s249
        // Predicated region
        $region41: #{tpu_custom_call.1} parent=31 // pred_check
          %p251 = pneg %p112
        $region42: #{tpu_custom_call.1} parent=31 // pred_check_branch
          %253 = sbr.rel (%p251) target = $region44
        $region43: #{tpu_custom_call.1} parent=31 // pred_region
          %254 = dma.done %s247, 256
        $region44: #{tpu_custom_call.1} parent=31 // pred_fallthru
          _
        %s255 = sand.u32 %s43, 1
        %s256 = scalar_lea.sflag [#allocation5], %s255
        %s257 = sand.u32 %s43, 1
        %s258 = smul.addr %s257, 16
        %s259 = scalar_lea.vmem [#allocation4], %s258
        %p260 = pneg %p56
        %p261 = pneg %p53
        %s262 = sand.u32 %s21, 1
        %s263 = scalar_lea.sflag [#allocation8], %s262
        %s264 = sand.u32 %s71, 1
        %s265 = smul.addr %s264, 16
        %s266 = scalar_lea.vmem [#allocation7], %s265
        %p267 = pneg %p84
        %p268 = pneg %p81
        %s269 = sand.u32 %s21, 1
        %s270 = scalar_lea.sflag [#allocation8], %s269
        %s271 = sand.u32 %s99, 1
        %s272 = smul.addr %s271, 16
        %s273 = scalar_lea.vmem [#allocation9], %s272
        %p274 = pneg %p112
        %p275 = pneg %p109
        %p276 = pneg %p133
        %p277 = pneg %p130
        %s278 = smul.u32 2, %s26
        %s279 = smul.u32 2, %s26
        %s280 = smul.u32 2, %s26
        %p281 = scmp.eq.s32.totalorder %s25, 0
        %p282 = scmp.eq.s32.totalorder %s26, 0
        %p283 = pnand %p281, %p282
        %p284 = pneg %p283
        // Predicated region
        $region45: #{tpu_custom_call.1} parent=31 // pred_check
          _
        $region46: #{tpu_custom_call.1} parent=31 // pred_check_branch
          %286 = sbr.rel (%p283) target = $region48
        $region47: #{tpu_custom_call.1} parent=31 // pred_region
          %vm287 = vcmask 0
          %288 = vst.msk [vmem:[#allocation2] sm:$0x1] %vm287, 0.0
          %289 = vst.msk [vmem:[#allocation3] sm:$0x1] %vm287, 0.0
        $region48: #{tpu_custom_call.1} parent=31 // pred_fallthru
          _
        %v290 = vld [vmem:[%s232] sm:$0xff]
        %v291 = vld [vmem:[%s232 + $0x8] sm:$0xff]
        %v292 = vld [vmem:[%s241] sm:$0xff]
        %v293 = vld [vmem:[%s241 + $0x8] sm:$0xff]
        %v294 = vld [vmem:[%s250] sm:$0xff]
        %v295 = vld [vmem:[%s250 + $0x8] sm:$0xff]
        %v296 = vld [vmem:[#allocation2] sm:$0x1]
        %v297 = vsub.f32 %v290, %v292
        %v298 = vsub.f32 %v291, %v293
        %v299 = vand.u32 2147483647, %v297
        %v300 = vand.u32 2147483647, %v298
        %v301 = vmul.f32 %v299, %v294
        %v302 = vmul.f32 %v300, %v295
        %vm303 = vcmask 130048
        %v304 = vsel %vm303, %v301, 0.0
        %v305 = vsel %vm303, %v302, 0.0
        %v306 = vadd.f32 %v304, %v305
        %307 = vadd.xlane.f32.xlu0 %v306
        %v308 = vpop.xlane.xlu0 %307
        %v309 = vrot.slane %v308, 4
        %v310 = vadd.f32 %v308, %v309
        %v311 = vrot.slane %v310, 2
        %v312 = vadd.f32 %v310, %v311
        %v313 = vrot.slane %v312, 1
        %v314 = vadd.f32 %v312, %v313
        %s315 = vtos %v314
        %v316 = vstv %s315
        %v317 = vadd.f32 %v296, %v316
        %vm318 = vcmask 0
        %319 = vst.msk [vmem:[#allocation2] sm:$0x1] %vm318, %v317
        %v320 = vld [vmem:[#allocation3] sm:$0x1]
        %v321 = vsel %vm303, %v294, 0.0
        %v322 = vsel %vm303, %v295, 0.0
        %v323 = vadd.f32 %v321, %v322
        %324 = vadd.xlane.f32.xlu0 %v323
        %v325 = vpop.xlane.xlu0 %324
        %v326 = vrot.slane %v325, 4
        %v327 = vadd.f32 %v325, %v326
        %v328 = vrot.slane %v327, 2
        %v329 = vadd.f32 %v327, %v328
        %v330 = vrot.slane %v329, 1
        %v331 = vadd.f32 %v329, %v330
        %s332 = vtos %v331
        %v333 = vstv %s332
        %v334 = vadd.f32 %v320, %v333
        %335 = vst.msk [vmem:[#allocation3] sm:$0x1] %vm318, %v334
        %p336 = scmp.eq.s32.totalorder %s25, 1
        %p337 = pnand %p336, %p282
        %p338 = pneg %p337
        // Predicated region
        $region49: #{tpu_custom_call.1} parent=31 // pred_check
          _
        $region50: #{tpu_custom_call.1} parent=31 // pred_check_branch
          %340 = sbr.rel (%p337) target = $region52
        $region51: #{tpu_custom_call.1} parent=31 // pred_region
          %v341 = vld [vmem:[#allocation2] sm:$0x1]
          %v342 = vld [vmem:[#allocation3] sm:$0x1]
          %vm343 = vcmp.eq.f32.partialorder %v342, 0.0
          %v344 = vrcp.pop %v342
          %v345 = vmul.f32 %v341, %v344
          %v346 = vsel %vm343, 0.0, %v345
          %347 = vst.msk [vmem:[#allocation10] sm:$0x1] %vm318, %v346
        $region52: #{tpu_custom_call.1} parent=31 // pred_fallthru
          _
        // Predicated region
        $region53: #{tpu_custom_call.1} parent=31 // pred_check
          %p348 = pneg %p130
        $region54: #{tpu_custom_call.1} parent=31 // pred_check_branch
          %350 = sbr.rel (%p348) target = $region56
        $region55: #{tpu_custom_call.1} parent=31 // pred_region
          %s352 = ssub.s32 16, 16
          %353 = vsyncadd [#allocation6], %s352
          %s355 = sshll.u32 [#allocation10], 4
          %s356 = int_to_ptr.vmem [resolvable:$true] %s355
          %358 = dma.vmem_to_hbm [thread:$0]  %s356, 16, %s3, [#allocation6]
        $region56: #{tpu_custom_call.1} parent=31 // pred_fallthru
          _
        // Predicated region
        $region57: #{tpu_custom_call.1} parent=31 // pred_check
          %p359 = pneg %p130
        $region58: #{tpu_custom_call.1} parent=31 // pred_check_branch
          %361 = sbr.rel (%p359) target = $region60
        $region59: #{tpu_custom_call.1} parent=31 // pred_region
          %362 = dma.done [#allocation6], 16
        $region60: #{tpu_custom_call.1} parent=31 // pred_fallthru
          _
      $region32: #{tpu_custom_call.1} parent=5 // pred_fallthru
        _
      %p363 = scmp.le.s32.totalorder 2, %s16
      // Predicated region
      $region61: #{tpu_custom_call.1} parent=5 // pred_check
        %p364 = pneg %p363
      $region62: #{tpu_custom_call.1} parent=5 // pred_check_branch
        %366 = sbr.rel (%p364) target = $region64
      $region63: #{tpu_custom_call.1} parent=5 // pred_region
        %s367 = ssub.s32 %s16, 2
      $region64: #{tpu_custom_call.1} parent=5 // pred_fallthru
        _
    $region6: #{tpu_custom_call.1} parent=1 // loop_footer
      %s20 = sadd.s32 1, %s16
    $region7: #{tpu_custom_call.1} parent=1 // loop_footer_branch
      %15 = sbr.rel target = $region3
    $region8: #{tpu_custom_call.1} parent=1 // loop_exit
      _
    %368 = vsyncpa [#allocation5], 1
    %s369 = scalar_lea.sflag [#allocation5], 1
    %370 = vsyncpa %s369, 1
    %371 = vsyncpa [#allocation8], 1
    %s372 = scalar_lea.sflag [#allocation8], 1
    %373 = vsyncpa %s372, 1
    %374 = vsyncpa [#allocation6], 1
    %s375 = scalar_lea.sflag [#allocation6], 1
    %376 = vsyncpa %s375, 1

</llo_original>
